<compile_context>
chip_gen: v5e
topology: v5e:2x2
jax: 0.10.0
libtpu: 0.0.40
codegen_flags: <defaults>
</compile_context>

<pallas_src>
import functools

import jax
import jax.numpy as jnp
from jax.experimental import pallas as pl
from jax.experimental.pallas import tpu as pltpu

COEFF = 12.0


def _softgate_kernel(x_ref, o_ref, *, compute_dtype):
    x = x_ref[...].astype(compute_dtype)
    # 12 * sigmoid(x) == 6 * tanh(x / 2) + 6  -- one EUP op per element instead
    # of exp + divide.  Differs from jax.nn.sigmoid by a few ULPs only.
    g = jnp.tanh(x * 0.5) * 6.0 + 6.0
    o_ref[...] = g.astype(o_ref.dtype)


def _round_up(a: int, b: int) -> int:
    return ((a + b - 1) // b) * b


def _device_info():
    """Returns (per-block VMEM byte target, bf16-native-vector-units)."""
    block_bytes, bf16_native = 2 << 20, False  # safe defaults (v5e: 16 MiB scoped VMEM)
    try:
        kind = jax.devices()[0].device_kind.lower()
    except Exception:
        return block_bytes, bf16_native
    if ("v6" in kind) or ("v7" in kind) or ("7x" in kind):
        # v6e / v7x: 32 MiB scoped-VMEM default -> 4 MiB blocks (~16 MiB pipelined
        # for in+out double-buffered); VPU/EUP handle bf16 natively.
        block_bytes, bf16_native = 4 << 20, True
    return block_bytes, bf16_native


def _pick_lane(numel: int) -> int:
    # Prefer lane-dense multiples of 128 (unmasked stores); else the largest
    # divisor <= 1024 so the reshape stays an exact, copy-free view.
    for lane in (1024, 512, 256, 128):
        if numel % lane == 0:
            return lane
    for lane in range(min(1024, numel), 0, -1):
        if numel % lane == 0:
            return lane
    return 1


def softgate(x: jax.Array, *, donate: bool = False) -> jax.Array:
    """SoftGate forward: sigmoid(x) * 12.0. Any shape / float dtype, same out."""
    orig_shape, dtype = x.shape, x.dtype
    numel = x.size  # static at trace time
    if numel == 0:
        return x
    itemsize = jnp.dtype(dtype).itemsize
    sub = {4: 8, 2: 16, 1: 32}.get(itemsize, 8)  # sublane granule per dtype

    block_bytes, bf16_native = _device_info()
    if dtype == jnp.float32 or (dtype == jnp.bfloat16 and bf16_native):
        compute_dtype = dtype
    else:
        compute_dtype = jnp.float32

    # Copy-free 2-D view of the flat stream.
    lane = _pick_lane(numel)
    rows = numel // lane
    x2d = x.reshape(rows, lane)

    # Row tile sized so one block is ~block_bytes of VMEM (accounting for lane
    # padding to 128).  Ragged last block is masked by Pallas -- no HBM padding
    # pass, garbage reads in the tail never get stored.
    lane_pad = _round_up(lane, 128)
    target_rows = max(sub, (block_bytes // (lane_pad * itemsize)) // sub * sub)
    if rows <= target_rows:
        if rows >= 2 * sub:
            # Split into >= 2 grid steps so v7x's two TensorCores both get work.
            row_tile = _round_up(pl.cdiv(rows, 2), sub)
        else:
            row_tile = rows  # single block; equals the full dim -> always legal
    else:
        row_tile = target_rows  # multiple of `sub`; grid has >= 2 steps

    grid = (pl.cdiv(rows, row_tile),)
    blk = (row_tile, lane)
    index_map = lambda i: (i, 0)

    out2d = pl.pallas_call(
        functools.partial(_softgate_kernel, compute_dtype=compute_dtype),
        out_shape=jax.ShapeDtypeStruct((rows, lane), dtype),
        grid_spec=pltpu.PrefetchScalarGridSpec(
            num_scalar_prefetch=0,
            grid=grid,
            in_specs=[pl.BlockSpec(blk, index_map)],
            out_specs=pl.BlockSpec(blk, index_map),
        ),
        compiler_params=pltpu.CompilerParams(
            dimension_semantics=("parallel",),
        ),
        # Only alias when the caller actually donates x; otherwise XLA inserts a
        # defensive copy (a whole extra HBM pass on a mem-bound op).
        input_output_aliases=({0: 0} if donate else {}),
        cost_estimate=pl.CostEstimate(
            flops=2 * numel,            # mul + add per element
            transcendentals=numel,      # one tanh per element
            bytes_accessed=2 * numel * itemsize,
        ),
    )(x2d)

    return out2d.reshape(orig_shape)


if __name__ == "__main__":
    key = jax.random.PRNGKey(0)
    # Small shapes consistent with the module's NCHW activations:
    #  - divisible lane-dense path, single block
    #  - non-128-divisible path (ragged, copy-free)
    #  - multi-step "parallel" grid path
    shapes = [(2, 4, 16, 16), (2, 8, 30, 30), (2, 16, 32, 32)]
    for i, shp in enumerate(shapes):
        k = jax.random.fold_in(key, i)
        x = jax.random.normal(k, shp, dtype=jnp.float32)
        out = softgate(x)
        jax.block_until_ready(out)
        ref = jax.nn.sigmoid(x) * COEFF
        assert out.shape == x.shape and out.dtype == x.dtype
        assert jnp.allclose(out, ref, atol=1e-4, rtol=1e-5), f"mismatch for {shp}"
    print("KERNEL_OK")
</pallas_src>

<mosaic_0001>
module attributes {stable_mosaic.version = 11 : i64} {
  func.func @_softgate_kernel(%arg0: i32, %arg1: memref<2x1024xf32, #tpu.memory_space<vmem>>, %arg2: memref<2x1024xf32, #tpu.memory_space<vmem>>) attributes {dimension_semantics = [#tpu.dimension_semantics<parallel>], iteration_bounds = array<i64: 1>, scalar_prefetch = 0 : i64, scratch_operands = 0 : i64, tpu.core_type = #tpu.core_type<tc>, window_params = [{transform_indices = @transform_0, window_bounds = array<i64: 2, 1024>}, {transform_indices = @transform_1, window_bounds = array<i64: 2, 1024>}]} {
    %c0 = arith.constant 0 : index
    %c0_0 = arith.constant 0 : index
    %0 = vector.load %arg1[%c0, %c0_0] : memref<2x1024xf32, #tpu.memory_space<vmem>>, vector<2x1024xf32>
    %cst = arith.constant 5.000000e-01 : f32
    %1 = vector.broadcast %cst : f32 to vector<2x1024xf32>
    %2 = arith.mulf %0, %1 : vector<2x1024xf32>
    %3 = math.tanh %2 : vector<2x1024xf32>
    %cst_1 = arith.constant 6.000000e+00 : f32
    %4 = vector.broadcast %cst_1 : f32 to vector<2x1024xf32>
    %5 = arith.mulf %3, %4 : vector<2x1024xf32>
    %cst_2 = arith.constant 6.000000e+00 : f32
    %6 = vector.broadcast %cst_2 : f32 to vector<2x1024xf32>
    %7 = arith.addf %5, %6 : vector<2x1024xf32>
    %c0_3 = arith.constant 0 : index
    %c0_4 = arith.constant 0 : index
    %8 = vector.load %arg2[%c0_3, %c0_4] : memref<2x1024xf32, #tpu.memory_space<vmem>>, vector<2x1024xf32>
    tpu.vector_store %arg2[%c0_3, %c0_4], %7 {strides = array<i32>} : memref<2x1024xf32, #tpu.memory_space<vmem>>, vector<2x1024xf32>,
    return
  }
  func.func @transform_0(%arg0: i32) -> (i32, i32) {
    %c0_i32 = arith.constant 0 : i32
    %c0_i32_0 = arith.constant 0 : i32
    return %arg0, %c0_i32 : i32, i32
  }
  func.func @transform_1(%arg0: i32) -> (i32, i32) {
    %c0_i32 = arith.constant 0 : i32
    %c0_i32_0 = arith.constant 0 : i32
    return %arg0, %c0_i32 : i32, i32
  }
}

</mosaic_0001>

<llo_original>
// kernel: tpu_custom_call.1
$region0: #{tpu_custom_call.1}
  #allocation0 [shape = 'u32[]', space=smem, size = 0x4, offset = 0x4, fixed_abs, tag = 'smem constant byte address 0x4 - core index']
  #allocation1 [shape = 'u32[72,128]{1,0:T(1,128)}', space=vmem, size = 0x9000, scoped, tag = 'internal scratch']
  %s0 = inlined_call_operand.hbm [shape: f32[2,1024], index: 0, kind: input, shape index: {}]
  %s1 = inlined_call_operand.hbm [shape: f32[2,1024], index: 1, kind: output, shape index: {}]
  %s2 = sld [smem:[#allocation0]]
  $region18: #{tpu_custom_call.1} parent=0
    _
  %s4 = ssub.s32 1, %s2
  %s5 = scalar_select 0, %s4, %s2
  $region1: #{tpu_custom_call.1} parent=0
    #allocation2 [shape = 'u8[8192]{0}', space=vmem, size = 0x2000, scoped, tag = 'input window, operand 0, single buffered']
    #allocation3 [shape = 's32[1]{0}', space=sflag, size = 0x4, scoped, tag = 'scoped memory for tpu_custom_call.1']
    #allocation4 [shape = 's32[1]{0}', space=sflag, size = 0x4, scoped, tag = 'scoped memory for tpu_custom_call.1']
    #allocation5 [shape = 'u8[8192]{0}', space=vmem, size = 0x2000, scoped, tag = 'output window, operand 0, single buffered']
    %6 = vsyncpa [#allocation3], 0
    %7 = vsyncpa [#allocation4], 0
    // Predicated region
    $region2: #{tpu_custom_call.1} parent=1 // pred_check
      _
    $region3: #{tpu_custom_call.1} parent=1 // pred_check_branch
      %9 = sbr.rel (0) target = $region5
    $region4: #{tpu_custom_call.1} parent=1 // pred_region
      %11 = vsyncadd [#allocation3], 0
      %s13 = sshll.u32 %s0, 4
      %s14 = int_to_ptr.hbm [resolvable:$true] %s13
      %s15 = sshll.u32 [#allocation2], 4
      %s16 = int_to_ptr.vmem [resolvable:$true] %s15
      %18 = dma.hbm_to_vmem [thread:$0]  %s14, 256, %s16, [#allocation3]
    $region5: #{tpu_custom_call.1} parent=1 // pred_fallthru
      _
    // Predicated region
    $region6: #{tpu_custom_call.1} parent=1 // pred_check
      _
    $region7: #{tpu_custom_call.1} parent=1 // pred_check_branch
      %20 = sbr.rel (0) target = $region9
    $region8: #{tpu_custom_call.1} parent=1 // pred_region
      %22 = dma.done [#allocation3], 256
    $region9: #{tpu_custom_call.1} parent=1 // pred_fallthru
      _
    %v23 = vld [vmem:[#allocation2] sm:$0xff]
    %v24 = vld [vmem:[#allocation2 + $0x8] sm:$0xff]
    %v25 = vmul.f32 %v23, 0.5
    %v26 = vmul.f32 %v24, 0.5
    %v27 = vtanh.pop %v25
    %v28 = vtanh.pop %v26
    %v29 = vmul.f32 %v27, 6.0
    %v30 = vmul.f32 %v28, 6.0
    %v31 = vadd.f32 %v29, 6.0
    %v32 = vadd.f32 %v30, 6.0
    %33 = vst [vmem:[#allocation5] sm:$0xff] %v31
    %34 = vst [vmem:[#allocation5 + $0x8] sm:$0xff] %v32
    // Predicated region
    $region10: #{tpu_custom_call.1} parent=1 // pred_check
      _
    $region11: #{tpu_custom_call.1} parent=1 // pred_check_branch
      %36 = sbr.rel (0) target = $region13
    $region12: #{tpu_custom_call.1} parent=1 // pred_region
      %38 = vsyncadd [#allocation4], 0
      %s40 = sshll.u32 [#allocation5], 4
      %s41 = int_to_ptr.vmem [resolvable:$true] %s40
      %s42 = sshll.u32 %s1, 4
      %s43 = int_to_ptr.hbm [resolvable:$true] %s42
      %45 = dma.vmem_to_hbm [thread:$0]  %s41, 256, %s43, [#allocation4]
    $region13: #{tpu_custom_call.1} parent=1 // pred_fallthru
      _
    // Predicated region
    $region14: #{tpu_custom_call.1} parent=1 // pred_check
      _
    $region15: #{tpu_custom_call.1} parent=1 // pred_check_branch
      %47 = sbr.rel (0) target = $region17
    $region16: #{tpu_custom_call.1} parent=1 // pred_region
      %49 = dma.done [#allocation4], 256
    $region17: #{tpu_custom_call.1} parent=1 // pred_fallthru
      _
    %50 = vsyncpa [#allocation3], 1
    %51 = vsyncpa [#allocation4], 1

</llo_original>
